<compile_context>
chip_gen: v7x
topology: tpu7x:2x2x1
jax: 0.10.0
libtpu: 0.0.40
codegen_flags: <defaults>
</compile_context>

<pallas_src>
import jax
import jax.numpy as jnp
from jax.experimental import pallas as pl
from jax.experimental.pallas import tpu as pltpu


# ------------------------------------------------------------------ #
# Fused kernel: temporal max-pool (k=3, s=2, p=1) + pointwise conv    #
# ------------------------------------------------------------------ #
def _fused_pool_conv_kernel(x_ref, w_ref, b_ref, o_ref):
    # x_ref: (1, n_segment, c_in, THW)
    # w_ref: (c_out, c_in)   b_ref: (c_out, 1) f32
    # o_ref: (1, n_out, c_out, THW)
    n_out = o_ref.shape[1]
    c_in = x_ref.shape[2]
    thw = x_ref.shape[3]

    x = x_ref[0]                                 # one full-tile load: (n_seg, c_in, THW)

    # --- temporal max-pool, vectorized over the whole tile -----------------
    # output frame t covers input frames {2t-1, 2t, 2t+1}; t == 0 has no left
    # neighbor (matches the -inf pad of max_pool3d), so no pad slab is needed.
    xr = x.reshape(n_out, 2, c_in, thw)          # leading-dim split only (free)
    even = xr[:, 0]                              # frames 2t       (n_out, c_in, THW)
    odd = xr[:, 1]                               # frames 2t + 1
    m = jnp.maximum(even, odd)                   # pairwise max, no -inf materialized

    # --- 1x1 conv (the wrapped `net`): contract the channel dim ------------
    wmat = w_ref[...]                            # resident weights (c_out, c_in)
    bias = b_ref[...]                            # resident bias (c_out, 1), f32

    for t in range(n_out):                       # tiny static unroll (n_out = n_segment//2)
        pooled_t = m[t] if t == 0 else jnp.maximum(m[t], odd[t - 1])
        zt = jnp.dot(wmat, pooled_t.astype(wmat.dtype),
                     preferred_element_type=jnp.float32)     # (c_out, THW) on the MXU
        # store inside the loop: no stack epilogue, vst overlaps the next MXU push
        o_ref[0, t] = (zt + bias).astype(o_ref.dtype)


# ------------------------------------------------------------------ #
# Tiling / VMEM planning                                              #
# ------------------------------------------------------------------ #
def _round_up(x, m):
    return -(-x // m) * m


def _sublane_rows(itemsize):
    # rows per (sublane x lane) tile: 8 for 4-byte, 16 for 2-byte, 32 for 1-byte
    return 8 * (4 // itemsize)


def _vmem_plan():
    """Return (working-set byte budget, vmem_limit ceiling) per TPU generation."""
    cap = None
    try:
        info = pltpu.get_tpu_info()
        cap = getattr(info, "vmem_capacity_bytes", None)
    except Exception:
        cap = None
    if cap is None:
        cap = 128 << 20
    if cap <= (64 << 20):            # v7x-class: 64 MiB VMEM per TensorCore
        return 18 << 20, 40 << 20
    return 40 << 20, 64 << 20        # v5e / v6e: 128 MiB physical VMEM


def temporal_pool_forward(x, n_segment, W, b):
    """Fused TemporalPool.forward: temporal max-pool (k3 s2 p1) + 1x1 conv (`net`)."""
    nt, c, h, w = x.shape
    assert nt % n_segment == 0, "nt must be a multiple of n_segment"
    assert n_segment % 2 == 0, "n_segment must be even (matches the nt//2 view)"
    assert jnp.issubdtype(x.dtype, jnp.floating), "pool/conv assume a floating dtype"

    n_batch = nt // n_segment
    n_out = n_segment // 2
    c_out = W.shape[0]
    HW = h * w

    in_elt = jnp.dtype(x.dtype).itemsize
    out_dtype = x.dtype
    out_elt = in_elt

    budget, limit_ceiling = _vmem_plan()

    # --- per-lane VMEM footprint (sublane-padded, incl. temporaries) -------
    c_pad = _round_up(c, _sublane_rows(in_elt))
    cout_pad = _round_up(c_out, _sublane_rows(out_elt))
    per_lane_in = n_segment * c_pad * in_elt
    per_lane_out = n_out * cout_pad * out_elt
    # 2x double-buffered in/out blocks + ~2x input block of temporaries (even/odd/m)
    # + one f32 conv-result row block
    per_lane_total = 2 * (per_lane_in + per_lane_out) + 2 * per_lane_in + cout_pad * 4

    # --- choose the lane tile -----------------------------------------------
    HW_pad0 = _round_up(HW, 128)
    thw_cap = max(128, (budget // per_lane_total) // 128 * 128)

    desired_nf = max(1, -(-4 // n_batch))                   # ~4+ total grid steps
    thw_steps = _round_up(-(-HW_pad0 // desired_nf), 128)
    lane_floor = min(512, HW_pad0)                          # stay lane-dense
    thw = max(min(thw_steps, thw_cap, HW_pad0), lane_floor)
    thw = min(thw, thw_cap, HW_pad0)                        # budget cap wins over floor
    if thw > 256 and thw % 256:
        thw = (thw // 256) * 256                            # match 256-wide MXU stream
    if n_batch == 1 and HW_pad0 > 128:                      # v7x: feed both TensorCores
        thw = min(thw, max(128, _round_up(-(-HW_pad0 // 2), 128)))
    thw = max(128, thw)

    HW_final = _round_up(HW, thw)                           # lane-dense, no masked tails
    n_f = HW_final // thw

    # --- data prep -----------------------------------------------------------
    xr = x.reshape(n_batch, n_segment, c, HW)
    if HW_final != HW:
        xr = jnp.pad(xr, ((0, 0), (0, 0), (0, 0), (0, HW_final - HW)))

    # MXU operands follow the input dtype (bf16 in -> bf16 x bf16 -> f32 acc)
    Wf = W.astype(x.dtype)
    br = b.reshape(c_out, 1).astype(jnp.float32)

    w_bytes = cout_pad * _round_up(max(c, 1), 128) * in_elt + cout_pad * 128 * 4
    working_set = per_lane_total * thw + w_bytes
    vmem_limit = int(min(limit_ceiling, max(16 << 20, working_set + (4 << 20))))

    cost = pl.CostEstimate(
        flops=int(2 * n_batch * n_out * c_out * c * HW_final        # conv MACs
                  + 2 * n_batch * n_out * c * HW_final),             # pool compares
        transcendentals=0,
        bytes_accessed=int(n_batch * n_segment * c * HW_final * in_elt
                           + n_batch * n_out * c_out * HW_final * out_elt
                           + Wf.size * in_elt + br.size * 4),
    )

    out = pl.pallas_call(
        _fused_pool_conv_kernel,
        out_shape=jax.ShapeDtypeStruct((n_batch, n_out, c_out, HW_final), out_dtype),
        grid_spec=pltpu.PrefetchScalarGridSpec(
            num_scalar_prefetch=0,
            grid=(n_batch, n_f),
            in_specs=[
                pl.BlockSpec((1, n_segment, c, thw), lambda bi, fi: (bi, 0, 0, fi)),
                pl.BlockSpec((c_out, c), lambda bi, fi: (0, 0)),      # resident weights
                pl.BlockSpec((c_out, 1), lambda bi, fi: (0, 0)),      # resident bias
            ],
            out_specs=pl.BlockSpec((1, n_out, c_out, thw),
                                   lambda bi, fi: (bi, 0, 0, fi)),
        ),
        compiler_params=pltpu.CompilerParams(
            dimension_semantics=("parallel", "parallel"),
            vmem_limit_bytes=vmem_limit,
        ),
        cost_estimate=cost,
    )(xr, Wf, br)

    if HW_final != HW:
        out = out[..., :HW]
    # kernel output is already time-major: pure reshape, no host transpose needed
    return out.reshape(n_batch * n_out, c_out, h, w)


# ------------------------------------------------------------------ #
# Pure-JAX reference (mirrors the PyTorch code path)                  #
# ------------------------------------------------------------------ #
def reference_forward(x, n_segment, W, b):
    nt, c, h, w = x.shape
    nb = nt // n_segment
    xr = x.reshape(nb, n_segment, c, h, w)
    pad = jnp.full((nb, 1, c, h, w), -jnp.inf, x.dtype)
    xp = jnp.concatenate([pad, xr, pad], axis=1)
    n_out = (n_segment + 2 - 3) // 2 + 1
    pooled = jnp.stack(
        [xp[:, 2 * o:2 * o + 3].max(axis=1) for o in range(n_out)], axis=1
    ).reshape(nb * n_out, c, h, w)
    z = jnp.einsum('nchw,oc->nohw', pooled, W) + b[None, :, None, None]
    return z


if __name__ == "__main__":
    key = jax.random.PRNGKey(0)
    kx, kw, kb = jax.random.split(key, 3)

    n_segment = 8
    n_batch = 2
    c, h, w = 4, 16, 16
    nt = n_batch * n_segment

    x = jax.random.normal(kx, (nt, c, h, w), dtype=jnp.float32)
    # deterministic synthetic 1x1-conv parameters for the wrapped `net`
    W = jax.random.normal(kw, (c, c), dtype=jnp.float32) * 0.1
    b = jax.random.normal(kb, (c,), dtype=jnp.float32) * 0.1

    out = temporal_pool_forward(x, n_segment, W, b)
    out = jax.block_until_ready(out)

    ref = reference_forward(x, n_segment, W, b)
    assert out.shape == (nt // 2, c, h, w), out.shape
    assert jnp.allclose(out, ref, atol=1e-5, rtol=1e-5), "mismatch vs reference"

    print("KERNEL_OK")
</pallas_src>

<mosaic_0001>
module attributes {stable_mosaic.version = 11 : i64} {
  func.func @_fused_pool_conv_kernel(%arg0: i32, %arg1: i32, %arg2: memref<1x8x4x256xf32, #tpu.memory_space<vmem>>, %arg3: memref<4x4xf32, #tpu.memory_space<vmem>>, %arg4: memref<4x1xf32, #tpu.memory_space<vmem>>, %arg5: memref<1x4x4x256xf32, #tpu.memory_space<vmem>>) attributes {dimension_semantics = [#tpu.dimension_semantics<parallel>, #tpu.dimension_semantics<parallel>], iteration_bounds = array<i64: 2, 1>, scalar_prefetch = 0 : i64, scratch_operands = 0 : i64, tpu.core_type = #tpu.core_type<tc>, window_params = [{transform_indices = @transform_0, window_bounds = array<i64: 1, 8, 4, 256>}, {pipeline_mode = #tpu.pipeline_mode<synchronous>, transform_indices = @transform_1, window_bounds = array<i64: 4, 4>}, {pipeline_mode = #tpu.pipeline_mode<synchronous>, transform_indices = @transform_2, window_bounds = array<i64: 4, 1>}, {transform_indices = @transform_3, window_bounds = array<i64: 1, 4, 4, 256>}]} {
    %c0 = arith.constant 0 : index
    %c0_0 = arith.constant 0 : index
    %c0_1 = arith.constant 0 : index
    %c0_2 = arith.constant 0 : index
    %0 = vector.load %arg2[%c0, %c0_0, %c0_1, %c0_2] : memref<1x8x4x256xf32, #tpu.memory_space<vmem>>, vector<1x8x4x256xf32>
    %1 = vector.shape_cast %0 : vector<1x8x4x256xf32> to vector<8x4x256xf32>
    %2 = vector.shape_cast %1 : vector<8x4x256xf32> to vector<4x2x4x256xf32>
    %3 = vector.extract_strided_slice %2 {offsets = [0, 0, 0, 0], sizes = [4, 1, 4, 256], strides = [1, 1, 1, 1]} : vector<4x2x4x256xf32> to vector<4x1x4x256xf32>
    %4 = vector.shape_cast %3 : vector<4x1x4x256xf32> to vector<4x4x256xf32>
    %5 = vector.extract_strided_slice %2 {offsets = [0, 1, 0, 0], sizes = [4, 1, 4, 256], strides = [1, 1, 1, 1]} : vector<4x2x4x256xf32> to vector<4x1x4x256xf32>
    %6 = vector.shape_cast %5 : vector<4x1x4x256xf32> to vector<4x4x256xf32>
    %7 = arith.maximumf %4, %6 : vector<4x4x256xf32>
    %c0_3 = arith.constant 0 : index
    %c0_4 = arith.constant 0 : index
    %8 = vector.load %arg3[%c0_3, %c0_4] : memref<4x4xf32, #tpu.memory_space<vmem>>, vector<4x4xf32>
    %c0_5 = arith.constant 0 : index
    %c0_6 = arith.constant 0 : index
    %9 = vector.load %arg4[%c0_5, %c0_6] : memref<4x1xf32, #tpu.memory_space<vmem>>, vector<4x1xf32>
    %10 = vector.extract_strided_slice %7 {offsets = [0, 0, 0], sizes = [1, 4, 256], strides = [1, 1, 1]} : vector<4x4x256xf32> to vector<1x4x256xf32>
    %11 = vector.shape_cast %10 : vector<1x4x256xf32> to vector<4x256xf32>
    %cst = arith.constant dense<0.000000e+00> : vector<4x256xf32>
    %12 = tpu.matmul %8, %11, %cst {dimension_numbers = #tpu.dot_dimension_numbers<[1], [0], [0], [1], [0, 0, 1, 1], [], []>} : vector<4x4xf32>, vector<4x256xf32>, vector<4x256xf32> -> vector<4x256xf32>
    %13 = vector.broadcast %9 : vector<4x1xf32> to vector<4x256xf32>
    %14 = arith.addf %12, %13 : vector<4x256xf32>
    %c0_7 = arith.constant 0 : index
    %c0_8 = arith.constant 0 : index
    %c0_9 = arith.constant 0 : index
    %c0_10 = arith.constant 0 : index
    %15 = vector.load %arg5[%c0_7, %c0_8, %c0_9, %c0_10] : memref<1x4x4x256xf32, #tpu.memory_space<vmem>>, vector<1x1x4x256xf32>
    %16 = vector.shape_cast %15 : vector<1x1x4x256xf32> to vector<4x256xf32>
    %17 = vector.shape_cast %14 : vector<4x256xf32> to vector<1x1x4x256xf32>
    tpu.vector_store %arg5[%c0_7, %c0_8, %c0_9, %c0_10], %17 {strides = array<i32>} : memref<1x4x4x256xf32, #tpu.memory_space<vmem>>, vector<1x1x4x256xf32>,
    %18 = vector.extract_strided_slice %7 {offsets = [1, 0, 0], sizes = [1, 4, 256], strides = [1, 1, 1]} : vector<4x4x256xf32> to vector<1x4x256xf32>
    %19 = vector.shape_cast %18 : vector<1x4x256xf32> to vector<4x256xf32>
    %20 = vector.extract_strided_slice %6 {offsets = [0, 0, 0], sizes = [1, 4, 256], strides = [1, 1, 1]} : vector<4x4x256xf32> to vector<1x4x256xf32>
    %21 = vector.shape_cast %20 : vector<1x4x256xf32> to vector<4x256xf32>
    %22 = arith.maximumf %19, %21 : vector<4x256xf32>
    %cst_11 = arith.constant dense<0.000000e+00> : vector<4x256xf32>
    %23 = tpu.matmul %8, %22, %cst_11 {dimension_numbers = #tpu.dot_dimension_numbers<[1], [0], [0], [1], [0, 0, 1, 1], [], []>} : vector<4x4xf32>, vector<4x256xf32>, vector<4x256xf32> -> vector<4x256xf32>
    %24 = vector.broadcast %9 : vector<4x1xf32> to vector<4x256xf32>
    %25 = arith.addf %23, %24 : vector<4x256xf32>
    %c0_12 = arith.constant 0 : index
    %c1 = arith.constant 1 : index
    %c0_13 = arith.constant 0 : index
    %c0_14 = arith.constant 0 : index
    %26 = vector.load %arg5[%c0_12, %c1, %c0_13, %c0_14] : memref<1x4x4x256xf32, #tpu.memory_space<vmem>>, vector<1x1x4x256xf32>
    %27 = vector.shape_cast %26 : vector<1x1x4x256xf32> to vector<4x256xf32>
    %28 = vector.shape_cast %25 : vector<4x256xf32> to vector<1x1x4x256xf32>
    tpu.vector_store %arg5[%c0_12, %c1, %c0_13, %c0_14], %28 {strides = array<i32>} : memref<1x4x4x256xf32, #tpu.memory_space<vmem>>, vector<1x1x4x256xf32>,
    %29 = vector.extract_strided_slice %7 {offsets = [2, 0, 0], sizes = [1, 4, 256], strides = [1, 1, 1]} : vector<4x4x256xf32> to vector<1x4x256xf32>
    %30 = vector.shape_cast %29 : vector<1x4x256xf32> to vector<4x256xf32>
    %31 = vector.extract_strided_slice %6 {offsets = [1, 0, 0], sizes = [1, 4, 256], strides = [1, 1, 1]} : vector<4x4x256xf32> to vector<1x4x256xf32>
    %32 = vector.shape_cast %31 : vector<1x4x256xf32> to vector<4x256xf32>
    %33 = arith.maximumf %30, %32 : vector<4x256xf32>
    %cst_15 = arith.constant dense<0.000000e+00> : vector<4x256xf32>
    %34 = tpu.matmul %8, %33, %cst_15 {dimension_numbers = #tpu.dot_dimension_numbers<[1], [0], [0], [1], [0, 0, 1, 1], [], []>} : vector<4x4xf32>, vector<4x256xf32>, vector<4x256xf32> -> vector<4x256xf32>
    %35 = vector.broadcast %9 : vector<4x1xf32> to vector<4x256xf32>
    %36 = arith.addf %34, %35 : vector<4x256xf32>
    %c0_16 = arith.constant 0 : index
    %c2 = arith.constant 2 : index
    %c0_17 = arith.constant 0 : index
    %c0_18 = arith.constant 0 : index
    %37 = vector.load %arg5[%c0_16, %c2, %c0_17, %c0_18] : memref<1x4x4x256xf32, #tpu.memory_space<vmem>>, vector<1x1x4x256xf32>
    %38 = vector.shape_cast %37 : vector<1x1x4x256xf32> to vector<4x256xf32>
    %39 = vector.shape_cast %36 : vector<4x256xf32> to vector<1x1x4x256xf32>
    tpu.vector_store %arg5[%c0_16, %c2, %c0_17, %c0_18], %39 {strides = array<i32>} : memref<1x4x4x256xf32, #tpu.memory_space<vmem>>, vector<1x1x4x256xf32>,
    %40 = vector.extract_strided_slice %7 {offsets = [3, 0, 0], sizes = [1, 4, 256], strides = [1, 1, 1]} : vector<4x4x256xf32> to vector<1x4x256xf32>
    %41 = vector.shape_cast %40 : vector<1x4x256xf32> to vector<4x256xf32>
    %42 = vector.extract_strided_slice %6 {offsets = [2, 0, 0], sizes = [1, 4, 256], strides = [1, 1, 1]} : vector<4x4x256xf32> to vector<1x4x256xf32>
    %43 = vector.shape_cast %42 : vector<1x4x256xf32> to vector<4x256xf32>
    %44 = arith.maximumf %41, %43 : vector<4x256xf32>
    %cst_19 = arith.constant dense<0.000000e+00> : vector<4x256xf32>
    %45 = tpu.matmul %8, %44, %cst_19 {dimension_numbers = #tpu.dot_dimension_numbers<[1], [0], [0], [1], [0, 0, 1, 1], [], []>} : vector<4x4xf32>, vector<4x256xf32>, vector<4x256xf32> -> vector<4x256xf32>
    %46 = vector.broadcast %9 : vector<4x1xf32> to vector<4x256xf32>
    %47 = arith.addf %45, %46 : vector<4x256xf32>
    %c0_20 = arith.constant 0 : index
    %c3 = arith.constant 3 : index
    %c0_21 = arith.constant 0 : index
    %c0_22 = arith.constant 0 : index
    %48 = vector.load %arg5[%c0_20, %c3, %c0_21, %c0_22] : memref<1x4x4x256xf32, #tpu.memory_space<vmem>>, vector<1x1x4x256xf32>
    %49 = vector.shape_cast %48 : vector<1x1x4x256xf32> to vector<4x256xf32>
    %50 = vector.shape_cast %47 : vector<4x256xf32> to vector<1x1x4x256xf32>
    tpu.vector_store %arg5[%c0_20, %c3, %c0_21, %c0_22], %50 {strides = array<i32>} : memref<1x4x4x256xf32, #tpu.memory_space<vmem>>, vector<1x1x4x256xf32>,
    return
  }
  func.func @transform_0(%arg0: i32, %arg1: i32) -> (i32, i32, i32, i32) {
    %c0_i32 = arith.constant 0 : i32
    %c0_i32_0 = arith.constant 0 : i32
    %c0_i32_1 = arith.constant 0 : i32
    return %arg0, %c0_i32, %c0_i32_0, %arg1 : i32, i32, i32, i32
  }
  func.func @transform_1(%arg0: i32, %arg1: i32) -> (i32, i32) {
    %c0_i32 = arith.constant 0 : i32
    %c0_i32_0 = arith.constant 0 : i32
    %c0_i32_1 = arith.constant 0 : i32
    return %c0_i32, %c0_i32_0 : i32, i32
  }
  func.func @transform_2(%arg0: i32, %arg1: i32) -> (i32, i32) {
    %c0_i32 = arith.constant 0 : i32
    %c0_i32_0 = arith.constant 0 : i32
    %c0_i32_1 = arith.constant 0 : i32
    return %c0_i32, %c0_i32_0 : i32, i32
  }
  func.func @transform_3(%arg0: i32, %arg1: i32) -> (i32, i32, i32, i32) {
    %c0_i32 = arith.constant 0 : i32
    %c0_i32_0 = arith.constant 0 : i32
    %c0_i32_1 = arith.constant 0 : i32
    return %arg0, %c0_i32, %c0_i32_0, %arg1 : i32, i32, i32, i32
  }
}

</mosaic_0001>

<llo_original>
// kernel: tpu_custom_call.1
$region0: #{tpu_custom_call.1}
  #allocation0 [shape = 'u32[]', space=smem, size = 0x4, offset = 0x4, fixed_abs, tag = 'smem constant byte address 0x4 - core index']
  #allocation1 [shape = 'u32[144,128]{1,0:T(1,128)}', space=vmem, size = 0x12000, scoped, tag = 'internal scratch']
  %s0 = inlined_call_operand.hbm [shape: f32[2,8,4,256], index: 0, kind: input, shape index: {}]
  %s1 = inlined_call_operand.vmem [shape: f32[4,4], index: 1, kind: input, shape index: {}]
  %s2 = inlined_call_operand.vmem [shape: f32[4,1], index: 2, kind: input, shape index: {}]
  %s3 = inlined_call_operand.hbm [shape: f32[2,4,4,256], index: 3, kind: output, shape index: {}]
  %s4 = sld [smem:[#allocation0]]
  $region49: #{tpu_custom_call.1} parent=0
    _
  %s6 = ssub.s32 1, %s4
  %s7 = scalar_select 0, %s6, %s4
  $region1: #{tpu_custom_call.1} parent=0
    #allocation2 [shape = 'u8[65536]{0}', space=vmem, size = 0x10000, scoped, tag = 'input window, operand 0']
    #allocation3 [shape = 's32[2]{0}', space=sflag, size = 0x8, scoped, tag = 'scoped memory for tpu_custom_call.1']
    #allocation4 [shape = 's32[2]{0}', space=sflag, size = 0x8, scoped, tag = 'scoped memory for tpu_custom_call.1']
    #allocation5 [shape = 'u8[32768]{0}', space=vmem, size = 0x8000, scoped, tag = 'output window, operand 0']
    %8 = vsyncpa [#allocation3], 0
    %s9 = scalar_lea.sflag [#allocation3], 1
    %10 = vsyncpa %s9, 0
    %11 = vsyncpa [#allocation4], 0
    %s12 = scalar_lea.sflag [#allocation4], 1
    %13 = vsyncpa %s12, 0
    loop: start=0, step=1, limit=4
    $region2: #{tpu_custom_call.1} parent=1 // loop_pre_header
      _
    $region3: #{tpu_custom_call.1} parent=1 // loop_header
      %s15 = sphi 0, %s19
      %p16 = scmp.ge.s32.totalorder %s15, 4
      %s22 = sphi 0, %s34
      %s23 = sphi 0, %s30
      %s24 = sphi 0, %s22
      %s25 = sphi 0, %s23
      %s26 = sphi 0, %s24
      %s27 = sphi 0, %s25
      %s39 = sphi 0, %s41
      %s42 = sphi 0, %s39
      %s43 = sphi 0, %s42
      %s59 = sphi 0, %s43
      %s63 = sphi 0, %s63
      %s65 = sphi 0, %s63
      %s66 = sphi 0, %s65
      %s80 = sphi 0, %s66
      %s84 = sphi 0, %s84
      %s86 = sphi 0, %s84
      %s87 = sphi 0, %s86
      %s101 = sphi 0, %s87
      %s109 = sphi 0, %s111
      %s112 = sphi 0, %s109
      %s113 = sphi 0, %s112
      %s129 = sphi 0, %s113
    $region4: #{tpu_custom_call.1} parent=1 // loop_header_branch
      %18 = sbr.rel (%p16) target = $region8
    $region5: #{tpu_custom_call.1} parent=1 // loop_body
      %s20 = ssub.s32 %s15, 1
      %s21 = ssub.s32 %s15, 2
      %s28 = sadd.s32 1, %s23
      %p29 = scmp.ge.s32.totalorder %s28, 1
      %s30 = scalar_select %p29, 0, %s28
      %s31 = sadd.s32 1, %s22
      %s32 = scalar_select %p29, %s31, %s22
      %p33 = scmp.ge.s32.totalorder %s32, 2
      %s34 = scalar_select %p33, 0, %s32
      %s35 = ssub.s32 %s22, %s34
      %s36 = ssub.s32 %s23, %s30
      %s37 = sor.u32 %s35, %s36
      %p38 = scmp.eq.s32.totalorder %s37, 0
      %s40 = sadd.s32 %s39, 1
      %s41 = scalar_select %p38, %s39, %s40
      %p44 = pneg %p38
      %p45 = scmp.eq.s32.totalorder %s15, 1
      %p46 = por %p44, %p45
      %p47 = scmp.ne.s32.totalorder %s39, %s42
      %p48 = scmp.eq.s32.totalorder %s15, 0
      %p49 = por %p47, %p48
      %p50 = scmp.ne.s32.totalorder %s39, %s42
      %p51 = scmp.eq.s32.totalorder %s20, 1
      %p52 = por %p50, %p51
      %p53 = scmp.ne.s32.totalorder %s42, %s43
      %p54 = scmp.eq.s32.totalorder %s20, 0
      %p55 = por %p53, %p54
      %p56 = scmp.ne.s32.totalorder %s42, %s43
      %p57 = scmp.eq.s32.totalorder %s21, 1
      %p58 = por %p56, %p57
      %p60 = scmp.ne.s32.totalorder %s43, %s59
      %p61 = scmp.eq.s32.totalorder %s21, 0
      %p62 = por %p60, %p61
      %s64 = sadd.s32 %s63, 1
      %p67 = scmp.eq.s32.totalorder %s15, 1
      %p68 = scmp.ne.s32.totalorder %s63, %s65
      %p69 = scmp.eq.s32.totalorder %s15, 0
      %p70 = por %p68, %p69
      %p71 = scmp.ne.s32.totalorder %s63, %s65
      %p72 = scmp.eq.s32.totalorder %s20, 1
      %p73 = por %p71, %p72
      %p74 = scmp.ne.s32.totalorder %s65, %s66
      %p75 = scmp.eq.s32.totalorder %s20, 0
      %p76 = por %p74, %p75
      %p77 = scmp.ne.s32.totalorder %s65, %s66
      %p78 = scmp.eq.s32.totalorder %s21, 1
      %p79 = por %p77, %p78
      %p81 = scmp.ne.s32.totalorder %s66, %s80
      %p82 = scmp.eq.s32.totalorder %s21, 0
      %p83 = por %p81, %p82
      %s85 = sadd.s32 %s84, 1
      %p88 = scmp.eq.s32.totalorder %s15, 1
      %p89 = scmp.ne.s32.totalorder %s84, %s86
      %p90 = scmp.eq.s32.totalorder %s15, 0
      %p91 = por %p89, %p90
      %p92 = scmp.ne.s32.totalorder %s84, %s86
      %p93 = scmp.eq.s32.totalorder %s20, 1
      %p94 = por %p92, %p93
      %p95 = scmp.ne.s32.totalorder %s86, %s87
      %p96 = scmp.eq.s32.totalorder %s20, 0
      %p97 = por %p95, %p96
      %p98 = scmp.ne.s32.totalorder %s86, %s87
      %p99 = scmp.eq.s32.totalorder %s21, 1
      %p100 = por %p98, %p99
      %p102 = scmp.ne.s32.totalorder %s87, %s101
      %p103 = scmp.eq.s32.totalorder %s21, 0
      %p104 = por %p102, %p103
      %s105 = ssub.s32 %s22, %s34
      %s106 = ssub.s32 %s23, %s30
      %s107 = sor.u32 %s105, %s106
      %p108 = scmp.eq.s32.totalorder %s107, 0
      %s110 = sadd.s32 %s109, 1
      %s111 = scalar_select %p108, %s109, %s110
      %p114 = pneg %p108
      %p115 = scmp.eq.s32.totalorder %s15, 1
      %p116 = por %p114, %p115
      %p117 = scmp.ne.s32.totalorder %s109, %s112
      %p118 = scmp.eq.s32.totalorder %s15, 0
      %p119 = por %p117, %p118
      %p120 = scmp.ne.s32.totalorder %s109, %s112
      %p121 = scmp.eq.s32.totalorder %s20, 1
      %p122 = por %p120, %p121
      %p123 = scmp.ne.s32.totalorder %s112, %s113
      %p124 = scmp.eq.s32.totalorder %s20, 0
      %p125 = por %p123, %p124
      %p126 = scmp.ne.s32.totalorder %s112, %s113
      %p127 = scmp.eq.s32.totalorder %s21, 1
      %p128 = por %p126, %p127
      %p130 = scmp.ne.s32.totalorder %s113, %s129
      %p131 = scmp.eq.s32.totalorder %s21, 0
      %p132 = por %p130, %p131
      %p133 = scmp.le.s32.totalorder 1, %s15
      %p134 = scmp.lt.s32.totalorder %s15, 3
      %p135 = pnand %p133, %p134
      %p136 = pneg %p135
      // Predicated region
      $region9: #{tpu_custom_call.1} parent=5 // pred_check
        _
      $region10: #{tpu_custom_call.1} parent=5 // pred_check_branch
        %138 = sbr.rel (%p135) target = $region12
      $region11: #{tpu_custom_call.1} parent=5 // pred_region
        %s139 = ssub.s32 %s15, 1
        // Predicated region
        $region13: #{tpu_custom_call.1} parent=11 // pred_check
          %p140 = pneg %p76
        $region14: #{tpu_custom_call.1} parent=11 // pred_check_branch
          %142 = sbr.rel (%p140) target = $region16
        $region15: #{tpu_custom_call.1} parent=11 // pred_region
          _
        $region16: #{tpu_custom_call.1} parent=11 // pred_fallthru
          _
        // Predicated region
        $region17: #{tpu_custom_call.1} parent=11 // pred_check
          %p143 = pneg %p97
        $region18: #{tpu_custom_call.1} parent=11 // pred_check_branch
          %145 = sbr.rel (%p143) target = $region20
        $region19: #{tpu_custom_call.1} parent=11 // pred_region
          _
        $region20: #{tpu_custom_call.1} parent=11 // pred_fallthru
          _
      $region12: #{tpu_custom_call.1} parent=5 // pred_fallthru
        _
      %p146 = scmp.lt.s32.totalorder %s15, 2
      // Predicated region
      $region21: #{tpu_custom_call.1} parent=5 // pred_check
        %p147 = pneg %p146
      $region22: #{tpu_custom_call.1} parent=5 // pred_check_branch
        %149 = sbr.rel (%p147) target = $region24
      $region23: #{tpu_custom_call.1} parent=5 // pred_region
        // Predicated region
        $region25: #{tpu_custom_call.1} parent=23 // pred_check
          %p150 = pneg %p49
        $region26: #{tpu_custom_call.1} parent=23 // pred_check_branch
          %152 = sbr.rel (%p150) target = $region28
        $region27: #{tpu_custom_call.1} parent=23 // pred_region
          %s153 = sand.u32 %s39, 1
          %s154 = scalar_lea.sflag [#allocation3], %s153
          %s155 = sand.u32 %s39, 1
          %s156 = smul.addr %s155, 64
          %s157 = scalar_lea.vmem [#allocation2], %s156
          %s158 = smul.u32 2, %s23
          %s160 = ssub.s32 1024, 1024
          %161 = vsyncadd %s154, %s160
          %s162 = smul.addr %s22, 16
          %s163 = sadd.s32 %s158, %s162
          %s164 = smul.addr %s163, 64
          %s165 = scalar_lea.hbm %s0, %s164
          %s166 = sshll.u32 %s157, 4
          %s167 = int_to_ptr.vmem [resolvable:$true] %s166
          %172 = dma.hbm_to_vmem [thread:$0]  %s165, 1024, %s167, %s154, 128, 128, 8
        $region28: #{tpu_custom_call.1} parent=23 // pred_fallthru
          _
      $region24: #{tpu_custom_call.1} parent=5 // pred_fallthru
        _
      %p173 = scmp.le.s32.totalorder 1, %s15
      %p174 = scmp.lt.s32.totalorder %s15, 3
      %p175 = pnand %p173, %p174
      %p176 = pneg %p175
      // Predicated region
      $region29: #{tpu_custom_call.1} parent=5 // pred_check
        _
      $region30: #{tpu_custom_call.1} parent=5 // pred_check_branch
        %178 = sbr.rel (%p175) target = $region32
      $region31: #{tpu_custom_call.1} parent=5 // pred_region
        %s179 = ssub.s32 %s15, 1
        %s180 = sand.u32 %s42, 1
        %s181 = scalar_lea.sflag [#allocation3], %s180
        %s182 = sand.u32 %s42, 1
        %s183 = smul.addr %s182, 64
        %s184 = scalar_lea.vmem [#allocation2], %s183
        // Predicated region
        $region33: #{tpu_custom_call.1} parent=31 // pred_check
          %p185 = pneg %p55
        $region34: #{tpu_custom_call.1} parent=31 // pred_check_branch
          %187 = sbr.rel (%p185) target = $region36
        $region35: #{tpu_custom_call.1} parent=31 // pred_region
          %188 = dma.done %s181, 1024
        $region36: #{tpu_custom_call.1} parent=31 // pred_fallthru
          _
        %s189 = sand.u32 %s42, 1
        %s190 = scalar_lea.sflag [#allocation3], %s189
        %s191 = sand.u32 %s42, 1
        %s192 = smul.addr %s191, 64
        %s193 = scalar_lea.vmem [#allocation2], %s192
        %p194 = pneg %p55
        %p195 = pneg %p52
        %p196 = pneg %p76
        %p197 = pneg %p73
        %p198 = pneg %p97
        %p199 = pneg %p94
        %p200 = pneg %p125
        %p201 = pneg %p122
        %s202 = sand.u32 %s112, 1
        %s203 = scalar_lea.sflag [#allocation4], %s202
        %s204 = sand.u32 %s112, 1
        %s205 = smul.addr %s204, 32
        %s206 = scalar_lea.vmem [#allocation5], %s205
        %s207 = smul.u32 2, %s25
        %s208 = smul.u32 2, %s25
        %v209 = vld [vmem:[%s184] sm:$0xff]
        %v210 = vld [vmem:[%s184 + $0x8] sm:$0xff]
        %v211 = vld [vmem:[%s184 + $0x10] sm:$0xff]
        %v212 = vld [vmem:[%s184 + $0x18] sm:$0xff]
        %v213 = vld [vmem:[%s184 + $0x20] sm:$0xff]
        %v214 = vld [vmem:[%s184 + $0x28] sm:$0xff]
        %v215 = vld [vmem:[%s184 + $0x30] sm:$0xff]
        %v216 = vld [vmem:[%s184 + $0x38] sm:$0xff]
        %v217 = vmax.f32 %v209, %v210
        %v218 = vmax.f32 %v211, %v212
        %v219 = vmax.f32 %v213, %v214
        %v220 = vmax.f32 %v215, %v216
        %v221 = vld [vmem:[%s1] sm:$0xf]
        %v222 = vld [vmem:[%s2] sm:$0xf]
        %224 = vset.pattern.permute.xlu0 0
        %225 = vperm.xlu0 %224, %v222
        %v226 = vpop.permute.xlu0 %225
        %v229 = vcombine.high %v217, %v217
        %vm230 = vcmask 31744
        %v232 = vsel %vm230, %v221, 0
        %vm234 = vcmask 1043456
        %v235 = vsel %vm234, %v217, 0
        %v237 = vsel %vm234, %v229, 0
        %239 = vmatprep.subr.mxu0 %v237
        %240 = vmatpush1.msra.mxu0 %v235
        %241 = vmatprep.subr.mxu0 0.0
        %242 = vmatpush1.msra.mxu0 0.0
        %243 = vmatprep.subr.mxu0 0.0
        %244 = vmatpush1.msra.mxu0 0.0
        %245 = vmatprep.subr.mxu0 0.0
        %246 = vmatpush1.msra.mxu0 0.0
        %247 = vmatprep.subr.mxu0 0.0
        %248 = vmatpush1.msra.mxu0 0.0
        %249 = vmatprep.subr.mxu0 0.0
        %250 = vmatpush1.msra.mxu0 0.0
        %251 = vmatprep.subr.mxu0 0.0
        %252 = vmatpush1.msra.mxu0 0.0
        %253 = vmatprep.subr.mxu0 0.0
        %254 = vmatpush1.msra.mxu0 0.0
        %255 = vmatprep.subr.mxu0 0.0
        %256 = vmatpush1.msra.mxu0 0.0
        %257 = vmatprep.subr.mxu0 0.0
        %258 = vmatpush1.msra.mxu0 0.0
        %259 = vmatprep.subr.mxu0 0.0
        %260 = vmatpush1.msra.mxu0 0.0
        %261 = vmatprep.subr.mxu0 0.0
        %262 = vmatpush1.msra.mxu0 0.0
        %263 = vmatprep.subr.mxu0 0.0
        %264 = vmatpush1.msra.mxu0 0.0
        %265 = vmatprep.subr.mxu0 0.0
        %266 = vmatpush1.msra.mxu0 0.0
        %267 = vmatprep.subr.mxu0 0.0
        %268 = vmatpush1.msra.mxu0 0.0
        %269 = vmatprep.subr.mxu0 0.0
        %270 = vmatpush1.msra.mxu0 0.0
        %271 = vmatprep.subr.mxu0 0.0
        %272 = vmatpush1.msra.mxu0 0.0
        %273 = vmatprep.subr.mxu0 0.0
        %274 = vmatpush1.msra.mxu0 0.0
        %275 = vmatprep.subr.mxu0 0.0
        %276 = vmatpush1.msra.mxu0 0.0
        %277 = vmatprep.subr.mxu0 0.0
        %278 = vmatpush1.msra.mxu0 0.0
        %279 = vmatprep.subr.mxu0 0.0
        %280 = vmatpush1.msra.mxu0 0.0
        %281 = vmatprep.subr.mxu0 0.0
        %282 = vmatpush1.msra.mxu0 0.0
        %283 = vmatprep.subr.mxu0 0.0
        %284 = vmatpush1.msra.mxu0 0.0
        %285 = vmatprep.subr.mxu0 0.0
        %286 = vmatpush1.msra.mxu0 0.0
        %287 = vmatprep.subr.mxu0 0.0
        %288 = vmatpush1.msra.mxu0 0.0
        %289 = vmatprep.subr.mxu0 0.0
        %290 = vmatpush1.msra.mxu0 0.0
        %291 = vmatprep.subr.mxu0 0.0
        %292 = vmatpush1.msra.mxu0 0.0
        %293 = vmatprep.subr.mxu0 0.0
        %294 = vmatpush1.msra.mxu0 0.0
        %295 = vmatprep.subr.mxu0 0.0
        %296 = vmatpush1.msra.mxu0 0.0
        %297 = vmatprep.subr.mxu0 0.0
        %298 = vmatpush1.msra.mxu0 0.0
        %299 = vmatprep.subr.mxu0 0.0
        %300 = vmatpush1.msra.mxu0 0.0
        %301 = vmatprep.subr.mxu0 0.0
        %302 = vmatpush1.msra.mxu0 0.0
        %303 = vmatprep.mubr.f32.mxu0 0.0
        %304 = vmatmul.mubr.f32.gmra.mrb[0].mxu0 %v232
        %v305 = vpop.f32.mrb[0].mxu0
        %v306 = vadd.f32 %v226, %v305
        %v307 = vpop.f32.mrb[0].mxu0
        %v308 = vadd.f32 %v226, %v307
        %309 = vdwg.mxu0
        %v312 = vcombine.low %v306, %v308
        %314 = vst [vmem:[%s206] sm:$0xff] %v312
        %v315 = vmax.f32 %v218, %v210
        %v317 = vcombine.high %v315, %v315
        %v318 = vsel %vm234, %v315, 0
        %v320 = vsel %vm234, %v317, 0
        %322 = vmatprep.subr.mxu0 %v320
        %323 = vmatpush1.msra.mxu0 %v318
        %324 = vmatprep.subr.mxu0 0.0
        %325 = vmatpush1.msra.mxu0 0.0
        %326 = vmatprep.subr.mxu0 0.0
        %327 = vmatpush1.msra.mxu0 0.0
        %328 = vmatprep.subr.mxu0 0.0
        %329 = vmatpush1.msra.mxu0 0.0
        %330 = vmatprep.subr.mxu0 0.0
        %331 = vmatpush1.msra.mxu0 0.0
        %332 = vmatprep.subr.mxu0 0.0
        %333 = vmatpush1.msra.mxu0 0.0
        %334 = vmatprep.subr.mxu0 0.0
        %335 = vmatpush1.msra.mxu0 0.0
        %336 = vmatprep.subr.mxu0 0.0
        %337 = vmatpush1.msra.mxu0 0.0
        %338 = vmatprep.subr.mxu0 0.0
        %339 = vmatpush1.msra.mxu0 0.0
        %340 = vmatprep.subr.mxu0 0.0
        %341 = vmatpush1.msra.mxu0 0.0
        %342 = vmatprep.subr.mxu0 0.0
        %343 = vmatpush1.msra.mxu0 0.0
        %344 = vmatprep.subr.mxu0 0.0
        %345 = vmatpush1.msra.mxu0 0.0
        %346 = vmatprep.subr.mxu0 0.0
        %347 = vmatpush1.msra.mxu0 0.0
        %348 = vmatprep.subr.mxu0 0.0
        %349 = vmatpush1.msra.mxu0 0.0
        %350 = vmatprep.subr.mxu0 0.0
        %351 = vmatpush1.msra.mxu0 0.0
        %352 = vmatprep.subr.mxu0 0.0
        %353 = vmatpush1.msra.mxu0 0.0
        %354 = vmatprep.subr.mxu0 0.0
        %355 = vmatpush1.msra.mxu0 0.0
        %356 = vmatprep.subr.mxu0 0.0
        %357 = vmatpush1.msra.mxu0 0.0
        %358 = vmatprep.subr.mxu0 0.0
        %359 = vmatpush1.msra.mxu0 0.0
        %360 = vmatprep.subr.mxu0 0.0
        %361 = vmatpush1.msra.mxu0 0.0
        %362 = vmatprep.subr.mxu0 0.0
        %363 = vmatpush1.msra.mxu0 0.0
        %364 = vmatprep.subr.mxu0 0.0
        %365 = vmatpush1.msra.mxu0 0.0
        %366 = vmatprep.subr.mxu0 0.0
        %367 = vmatpush1.msra.mxu0 0.0
        %368 = vmatprep.subr.mxu0 0.0
        %369 = vmatpush1.msra.mxu0 0.0
        %370 = vmatprep.subr.mxu0 0.0
        %371 = vmatpush1.msra.mxu0 0.0
        %372 = vmatprep.subr.mxu0 0.0
        %373 = vmatpush1.msra.mxu0 0.0
        %374 = vmatprep.subr.mxu0 0.0
        %375 = vmatpush1.msra.mxu0 0.0
        %376 = vmatprep.subr.mxu0 0.0
        %377 = vmatpush1.msra.mxu0 0.0
        %378 = vmatprep.subr.mxu0 0.0
        %379 = vmatpush1.msra.mxu0 0.0
        %380 = vmatprep.subr.mxu0 0.0
        %381 = vmatpush1.msra.mxu0 0.0
        %382 = vmatprep.subr.mxu0 0.0
        %383 = vmatpush1.msra.mxu0 0.0
        %384 = vmatprep.subr.mxu0 0.0
        %385 = vmatpush1.msra.mxu0 0.0
        %386 = vmatprep.mubr.f32.mxu0 0.0
        %387 = vmatmul.mubr.f32.gmra.mrb[0].mxu0 %v232
        %v388 = vpop.f32.mrb[0].mxu0
        %v389 = vadd.f32 %v226, %v388
        %v390 = vpop.f32.mrb[0].mxu0
        %v391 = vadd.f32 %v226, %v390
        %392 = vdwg.mxu0
        %v395 = vcombine.low %v389, %v391
        %s397 = scalar_lea.vmem %s206, 8 [#allocation5]
        %398 = vst [vmem:[%s397] sm:$0xff] %v395
        %v399 = vmax.f32 %v219, %v212
        %v401 = vcombine.high %v399, %v399
        %v402 = vsel %vm234, %v399, 0
        %v404 = vsel %vm234, %v401, 0
        %406 = vmatprep.subr.mxu0 %v404
        %407 = vmatpush1.msra.mxu0 %v402
        %408 = vmatprep.subr.mxu0 0.0
        %409 = vmatpush1.msra.mxu0 0.0
        %410 = vmatprep.subr.mxu0 0.0
        %411 = vmatpush1.msra.mxu0 0.0
        %412 = vmatprep.subr.mxu0 0.0
        %413 = vmatpush1.msra.mxu0 0.0
        %414 = vmatprep.subr.mxu0 0.0
        %415 = vmatpush1.msra.mxu0 0.0
        %416 = vmatprep.subr.mxu0 0.0
        %417 = vmatpush1.msra.mxu0 0.0
        %418 = vmatprep.subr.mxu0 0.0
        %419 = vmatpush1.msra.mxu0 0.0
        %420 = vmatprep.subr.mxu0 0.0
        %421 = vmatpush1.msra.mxu0 0.0
        %422 = vmatprep.subr.mxu0 0.0
        %423 = vmatpush1.msra.mxu0 0.0
        %424 = vmatprep.subr.mxu0 0.0
        %425 = vmatpush1.msra.mxu0 0.0
        %426 = vmatprep.subr.mxu0 0.0
        %427 = vmatpush1.msra.mxu0 0.0
        %428 = vmatprep.subr.mxu0 0.0
        %429 = vmatpush1.msra.mxu0 0.0
        %430 = vmatprep.subr.mxu0 0.0
        %431 = vmatpush1.msra.mxu0 0.0
        %432 = vmatprep.subr.mxu0 0.0
        %433 = vmatpush1.msra.mxu0 0.0
        %434 = vmatprep.subr.mxu0 0.0
        %435 = vmatpush1.msra.mxu0 0.0
        %436 = vmatprep.subr.mxu0 0.0
        %437 = vmatpush1.msra.mxu0 0.0
        %438 = vmatprep.subr.mxu0 0.0
        %439 = vmatpush1.msra.mxu0 0.0
        %440 = vmatprep.subr.mxu0 0.0
        %441 = vmatpush1.msra.mxu0 0.0
        %442 = vmatprep.subr.mxu0 0.0
        %443 = vmatpush1.msra.mxu0 0.0
        %444 = vmatprep.subr.mxu0 0.0
        %445 = vmatpush1.msra.mxu0 0.0
        %446 = vmatprep.subr.mxu0 0.0
        %447 = vmatpush1.msra.mxu0 0.0
        %448 = vmatprep.subr.mxu0 0.0
        %449 = vmatpush1.msra.mxu0 0.0
        %450 = vmatprep.subr.mxu0 0.0
        %451 = vmatpush1.msra.mxu0 0.0
        %452 = vmatprep.subr.mxu0 0.0
        %453 = vmatpush1.msra.mxu0 0.0
        %454 = vmatprep.subr.mxu0 0.0
        %455 = vmatpush1.msra.mxu0 0.0
        %456 = vmatprep.subr.mxu0 0.0
        %457 = vmatpush1.msra.mxu0 0.0
        %458 = vmatprep.subr.mxu0 0.0
        %459 = vmatpush1.msra.mxu0 0.0
        %460 = vmatprep.subr.mxu0 0.0
        %461 = vmatpush1.msra.mxu0 0.0
        %462 = vmatprep.subr.mxu0 0.0
        %463 = vmatpush1.msra.mxu0 0.0
        %464 = vmatprep.subr.mxu0 0.0
        %465 = vmatpush1.msra.mxu0 0.0
        %466 = vmatprep.subr.mxu0 0.0
        %467 = vmatpush1.msra.mxu0 0.0
        %468 = vmatprep.subr.mxu0 0.0
        %469 = vmatpush1.msra.mxu0 0.0
        %470 = vmatprep.mubr.f32.mxu0 0.0
        %471 = vmatmul.mubr.f32.gmra.mrb[0].mxu0 %v232
        %v472 = vpop.f32.mrb[0].mxu0
        %v473 = vadd.f32 %v226, %v472
        %v474 = vpop.f32.mrb[0].mxu0
        %v475 = vadd.f32 %v226, %v474
        %476 = vdwg.mxu0
        %v479 = vcombine.low %v473, %v475
        %s481 = scalar_lea.vmem %s206, 16 [#allocation5]
        %482 = vst [vmem:[%s481] sm:$0xff] %v479
        %v483 = vmax.f32 %v220, %v214
        %v485 = vcombine.high %v483, %v483
        %v486 = vsel %vm234, %v483, 0
        %v488 = vsel %vm234, %v485, 0
        %490 = vmatprep.subr.mxu0 %v488
        %491 = vmatpush1.msra.mxu0 %v486
        %492 = vmatprep.subr.mxu0 0.0
        %493 = vmatpush1.msra.mxu0 0.0
        %494 = vmatprep.subr.mxu0 0.0
        %495 = vmatpush1.msra.mxu0 0.0
        %496 = vmatprep.subr.mxu0 0.0
        %497 = vmatpush1.msra.mxu0 0.0
        %498 = vmatprep.subr.mxu0 0.0
        %499 = vmatpush1.msra.mxu0 0.0
        %500 = vmatprep.subr.mxu0 0.0
        %501 = vmatpush1.msra.mxu0 0.0
        %502 = vmatprep.subr.mxu0 0.0
        %503 = vmatpush1.msra.mxu0 0.0
        %504 = vmatprep.subr.mxu0 0.0
        %505 = vmatpush1.msra.mxu0 0.0
        %506 = vmatprep.subr.mxu0 0.0
        %507 = vmatpush1.msra.mxu0 0.0
        %508 = vmatprep.subr.mxu0 0.0
        %509 = vmatpush1.msra.mxu0 0.0
        %510 = vmatprep.subr.mxu0 0.0
        %511 = vmatpush1.msra.mxu0 0.0
        %512 = vmatprep.subr.mxu0 0.0
        %513 = vmatpush1.msra.mxu0 0.0
        %514 = vmatprep.subr.mxu0 0.0
        %515 = vmatpush1.msra.mxu0 0.0
        %516 = vmatprep.subr.mxu0 0.0
        %517 = vmatpush1.msra.mxu0 0.0
        %518 = vmatprep.subr.mxu0 0.0
        %519 = vmatpush1.msra.mxu0 0.0
        %520 = vmatprep.subr.mxu0 0.0
        %521 = vmatpush1.msra.mxu0 0.0
        %522 = vmatprep.subr.mxu0 0.0
        %523 = vmatpush1.msra.mxu0 0.0
        %524 = vmatprep.subr.mxu0 0.0
        %525 = vmatpush1.msra.mxu0 0.0
        %526 = vmatprep.subr.mxu0 0.0
        %527 = vmatpush1.msra.mxu0 0.0
        %528 = vmatprep.subr.mxu0 0.0
        %529 = vmatpush1.msra.mxu0 0.0
        %530 = vmatprep.subr.mxu0 0.0
        %531 = vmatpush1.msra.mxu0 0.0
        %532 = vmatprep.subr.mxu0 0.0
        %533 = vmatpush1.msra.mxu0 0.0
        %534 = vmatprep.subr.mxu0 0.0
        %535 = vmatpush1.msra.mxu0 0.0
        %536 = vmatprep.subr.mxu0 0.0
        %537 = vmatpush1.msra.mxu0 0.0
        %538 = vmatprep.subr.mxu0 0.0
        %539 = vmatpush1.msra.mxu0 0.0
        %540 = vmatprep.subr.mxu0 0.0
        %541 = vmatpush1.msra.mxu0 0.0
        %542 = vmatprep.subr.mxu0 0.0
        %543 = vmatpush1.msra.mxu0 0.0
        %544 = vmatprep.subr.mxu0 0.0
        %545 = vmatpush1.msra.mxu0 0.0
        %546 = vmatprep.subr.mxu0 0.0
        %547 = vmatpush1.msra.mxu0 0.0
        %548 = vmatprep.subr.mxu0 0.0
        %549 = vmatpush1.msra.mxu0 0.0
        %550 = vmatprep.subr.mxu0 0.0
        %551 = vmatpush1.msra.mxu0 0.0
        %552 = vmatprep.subr.mxu0 0.0
        %553 = vmatpush1.msra.mxu0 0.0
        %554 = vmatprep.mubr.f32.mxu0 0.0
        %555 = vmatmul.mubr.f32.gmra.mrb[0].mxu0 %v232
        %v556 = vpop.f32.mrb[0].mxu0
        %v557 = vadd.f32 %v226, %v556
        %v558 = vpop.f32.mrb[0].mxu0
        %v559 = vadd.f32 %v226, %v558
        %560 = vdwg.mxu0
        %v563 = vcombine.low %v557, %v559
        %s565 = scalar_lea.vmem %s206, 24 [#allocation5]
        %566 = vst [vmem:[%s565] sm:$0xff] %v563
        %s567 = sand.u32 %s112, 1
        %s568 = scalar_lea.sflag [#allocation4], %s567
        %s569 = sand.u32 %s112, 1
        %s570 = smul.addr %s569, 32
        %s571 = scalar_lea.vmem [#allocation5], %s570
        // Predicated region
        $region37: #{tpu_custom_call.1} parent=31 // pred_check
          %p572 = pneg %p122
        $region38: #{tpu_custom_call.1} parent=31 // pred_check_branch
          %574 = sbr.rel (%p572) target = $region40
        $region39: #{tpu_custom_call.1} parent=31 // pred_region
          %s575 = smul.u32 2, %s25
          %s577 = ssub.s32 512, 512
          %578 = vsyncadd %s568, %s577
          %s579 = smul.addr %s24, 8
          %s580 = sadd.s32 %s575, %s579
          %s581 = smul.addr %s580, 64
          %s582 = scalar_lea.hbm %s3, %s581
          %s583 = sshll.u32 %s571, 4
          %s584 = int_to_ptr.vmem [resolvable:$true] %s583
          %589 = dma.vmem_to_hbm [thread:$0]  %s584, 512, %s582, %s568, 128, 128, 8
        $region40: #{tpu_custom_call.1} parent=31 // pred_fallthru
          _
      $region32: #{tpu_custom_call.1} parent=5 // pred_fallthru
        _
      %p590 = scmp.le.s32.totalorder 2, %s15
      // Predicated region
      $region41: #{tpu_custom_call.1} parent=5 // pred_check
        %p591 = pneg %p590
      $region42: #{tpu_custom_call.1} parent=5 // pred_check_branch
        %593 = sbr.rel (%p591) target = $region44
      $region43: #{tpu_custom_call.1} parent=5 // pred_region
        %s594 = ssub.s32 %s15, 2
        // Predicated region
        $region45: #{tpu_custom_call.1} parent=43 // pred_check
          %p595 = pneg %p128
        $region46: #{tpu_custom_call.1} parent=43 // pred_check_branch
          %597 = sbr.rel (%p595) target = $region48
        $region47: #{tpu_custom_call.1} parent=43 // pred_region
          %s598 = sand.u32 %s113, 1
          %s599 = scalar_lea.sflag [#allocation4], %s598
          %s600 = sand.u32 %s113, 1
          %s601 = smul.addr %s600, 32
          %s602 = scalar_lea.vmem [#allocation5], %s601
          %603 = dma.done %s599, 512
        $region48: #{tpu_custom_call.1} parent=43 // pred_fallthru
          _
      $region44: #{tpu_custom_call.1} parent=5 // pred_fallthru
        _
    $region6: #{tpu_custom_call.1} parent=1 // loop_footer
      %s19 = sadd.s32 1, %s15
    $region7: #{tpu_custom_call.1} parent=1 // loop_footer_branch
      %14 = sbr.rel target = $region3
    $region8: #{tpu_custom_call.1} parent=1 // loop_exit
      _
    %604 = vsyncpa [#allocation3], 1
    %s605 = scalar_lea.sflag [#allocation3], 1
    %606 = vsyncpa %s605, 1
    %607 = vsyncpa [#allocation4], 1
    %s608 = scalar_lea.sflag [#allocation4], 1
    %609 = vsyncpa %s608, 1

</llo_original>
